<compile_context>
chip_gen: v7x
topology: tpu7x:2x2x1
jax: 0.10.0
libtpu: 0.0.40
codegen_flags: <defaults>
</compile_context>

<pallas_src>
import functools

import jax
import jax.numpy as jnp
from jax.experimental import pallas as pl
from jax.experimental.pallas import tpu as pltpu

EPS = 1e-12
POWER_ITERATIONS = 1


def _round_up(x, m):
    return ((x + m - 1) // m) * m


def _vmem_capacity_bytes():
    """Physical VMEM per core; falls back to the smallest generation (v7x, 64 MiB)."""
    try:
        cap = getattr(pltpu.get_tpu_info(), "vmem_capacity_bytes", None)
        if cap:
            return int(cap)
    except Exception:
        pass
    return 64 << 20


# -----------------------------------------------------------------------------
# Kernel 1: spectral-norm power iteration on the flattened weight W (O, K).
#   v = l2normalize(W^T u) ; u = l2normalize(W v) ; sigma = u . (W v)
# Emits 1/sigma (folded into the conv weight outside) plus updated u, v.
# -----------------------------------------------------------------------------
def _spectral_norm_kernel(w_ref, u_ref, v_ref, inv_sigma_ref, u_out_ref, v_out_ref):
    w = w_ref[...].astype(jnp.float32)   # (O, K)
    u = u_ref[...].astype(jnp.float32)   # (1, O)
    v = v_ref[...].astype(jnp.float32)   # (1, K)

    for _ in range(POWER_ITERATIONS):
        # v = l2normalize(W^T @ u)  ==  l2normalize(u @ W)
        v = jnp.dot(u, w, preferred_element_type=jnp.float32)            # (1, K)
        v_norm = jnp.sqrt(jnp.sum(v * v, keepdims=True))                 # (1, 1)
        v = v * pl.reciprocal(v_norm + EPS, approx=False)
        # u = l2normalize(W @ v)   (contract last dims to avoid a transpose)
        wv = jax.lax.dot_general(v, w, (((1,), (1,)), ((), ())),
                                 preferred_element_type=jnp.float32)     # (1, O)
        u_norm = jnp.sqrt(jnp.sum(wv * wv, keepdims=True))               # (1, 1)
        u = wv * pl.reciprocal(u_norm + EPS, approx=False)

    # sigma = u . (W v), recomputed with the final v exactly like PyTorch.
    wv = jax.lax.dot_general(v, w, (((1,), (1,)), ((), ())),
                             preferred_element_type=jnp.float32)         # (1, O)
    sigma = jnp.sum(u * wv, keepdims=True)                               # (1, 1)

    inv_sigma_ref[...] = pl.reciprocal(sigma, approx=False)
    u_out_ref[...] = u.astype(u_out_ref.dtype)
    v_out_ref[...] = v.astype(v_out_ref.dtype)


def spectral_inv_sigma(w2d, u, v):
    O, K = w2d.shape
    cap = _vmem_capacity_bytes()
    # Full f32 W is double-buffered even with grid=(1,); size the limit for it.
    need = 2 * O * K * 4 + 8 * (O + K + 2) * 4
    vmem_limit = int(min(int(cap * 0.75), max(32 << 20, need + (4 << 20))))
    inv_sigma, u_new, v_new = pl.pallas_call(
        _spectral_norm_kernel,
        out_shape=(
            jax.ShapeDtypeStruct((1, 1), jnp.float32),
            jax.ShapeDtypeStruct((1, O), u.dtype),
            jax.ShapeDtypeStruct((1, K), v.dtype),
        ),
        grid=(1,),
        in_specs=[
            pl.BlockSpec((O, K), lambda i: (0, 0)),
            pl.BlockSpec((1, O), lambda i: (0, 0)),
            pl.BlockSpec((1, K), lambda i: (0, 0)),
        ],
        out_specs=(
            pl.BlockSpec((1, 1), lambda i: (0, 0)),
            pl.BlockSpec((1, O), lambda i: (0, 0)),
            pl.BlockSpec((1, K), lambda i: (0, 0)),
        ),
        compiler_params=pltpu.CompilerParams(vmem_limit_bytes=vmem_limit),
    )(w2d, u.reshape(1, O), v.reshape(1, K))
    return inv_sigma, u_new.reshape(O), v_new.reshape(K)


# -----------------------------------------------------------------------------
# Kernel 2: conv2d with im2col fused into the kernel.
# Input is the zero-padded image flattened per channel to (C, Lpad); the output
# flat index j = h*Wp + w, and tap (kh, kw) simply reads x at j + kh*Wp + kw.
# Each grid step handles one image x one channel block and accumulates the
# k*k tap matmuls into an f32 scratch; the channel-block axis is the reduction.
# -----------------------------------------------------------------------------
def _conv_fused_kernel(x_ref, w_ref, b_ref, o_ref, acc_ref, *, ksz, wp, lout):
    c_idx = pl.program_id(1)

    @pl.when(c_idx == 0)
    def _():
        acc_ref[...] = jnp.zeros_like(acc_ref)

    xb = x_ref[0]                         # (C_blk, Lpad), compute dtype (bf16)
    acc = acc_ref[...]                    # (O, Lout) f32
    for kh in range(ksz):
        for kw in range(ksz):
            shift = kh * wp + kw
            xs = xb[:, shift:shift + lout]                     # (C_blk, Lout)
            acc = acc + jnp.dot(w_ref[kh * ksz + kw], xs,
                                preferred_element_type=jnp.float32)
    acc_ref[...] = acc

    @pl.when(c_idx == pl.num_programs(1) - 1)
    def _():
        # 1/sigma is already folded into the weight; epilogue = bias + cast.
        o_ref[0] = (acc_ref[...] + b_ref[...]).astype(o_ref.dtype)


def _conv_vmem_need(c_blk, lpad, lout, O, kk, cbytes, obytes):
    # double-buffered x block + (grid-constant) weight/bias blocks
    # + double-buffered output block + f32 accumulator scratch.
    return (2 * c_blk * lpad * cbytes + 2 * kk * O * c_blk * cbytes
            + 2 * O * 4 + 2 * O * lout * obytes + O * lout * 4)


def _pick_c_block(C, lpad, lout, O, kk, cbytes, obytes, budget):
    if C <= 128 or _conv_vmem_need(C, lpad, lout, O, kk, cbytes, obytes) <= budget:
        return C
    fixed = 2 * O * 4 + 2 * O * lout * obytes + O * lout * 4
    per_c = 2 * lpad * cbytes + 2 * kk * O * cbytes
    cb = (max(budget - fixed, 0) // per_c // 128) * 128
    return int(max(128, cb))


def conv2d_spectral(x, w_bar, bias, inv_sigma, *, pad,
                    compute_dtype=jnp.bfloat16, out_dtype=jnp.float32):
    """out = conv2d(x, w_bar * inv_sigma, stride=1, zero-pad `pad`) + bias."""
    N, C, H, W = x.shape
    O, _, k, _ = w_bar.shape
    kk = k * k
    hp, wp = H + 2 * pad, W + 2 * pad
    h_out = H + 2 * pad - k + 1
    w_out = W + 2 * pad - k + 1
    lout = _round_up(h_out * wp, 128)              # lane-dense output length
    smax = (k - 1) * wp + (k - 1)                  # largest in-kernel shift
    lpad = lout + (_round_up(smax, 128) if smax else 0)

    cap = _vmem_capacity_bytes()
    cbytes = jnp.dtype(compute_dtype).itemsize
    obytes = jnp.dtype(out_dtype).itemsize
    c_blk = _pick_c_block(C, lpad, lout, O, kk, cbytes, obytes, budget=cap // 4)
    c_pad = _round_up(C, c_blk)
    # TODO(synk): images whose padded plane exceeds the VMEM budget at C<=128
    # need spatial tiling with halos (Element-offset or manual DMA); not done.

    # Weight: fold 1/sigma (tiny), rearrange to (k*k, O, C) so each tap is a
    # contiguous (O, C_blk) MXU operand, cast to the MXU compute dtype.
    w_kk = (jnp.transpose(w_bar, (2, 3, 0, 1)).reshape(kk, O, C)
            * inv_sigma[0, 0]).astype(compute_dtype)

    # Input: one cheap, input-sized XLA pass -> zero-padded, flattened, bf16.
    # TODO(synk): this pad/flatten pass could also move into the kernel (zeroed
    # VMEM scratch + interior store) to remove one more input-sized HBM pass.
    xp = jnp.pad(x, ((0, 0), (0, 0), (pad, pad), (pad, pad)))
    xflat = xp.reshape(N, C, hp * wp)
    xflat = jnp.pad(xflat, ((0, 0), (0, 0), (0, lpad - hp * wp)))
    if c_pad != C:
        xflat = jnp.pad(xflat, ((0, 0), (0, c_pad - C), (0, 0)))
        w_kk = jnp.pad(w_kk, ((0, 0), (0, 0), (0, c_pad - C)))
    xflat = xflat.astype(compute_dtype)

    need = _conv_vmem_need(c_blk, lpad, lout, O, kk, cbytes, obytes)
    vmem_limit = int(min(int(cap * 0.75), max(32 << 20, need + (8 << 20))))

    kernel = functools.partial(_conv_fused_kernel, ksz=k, wp=wp, lout=lout)
    out_flat = pl.pallas_call(
        kernel,
        out_shape=jax.ShapeDtypeStruct((N, O, lout), out_dtype),
        grid=(N, c_pad // c_blk),
        in_specs=[
            pl.BlockSpec((1, c_blk, lpad), lambda n, c: (n, c, 0)),
            # Weight/bias index maps are grid-constant, so they are DMA'd once
            # (pl.Buffered(1) would additionally drop their second VMEM buffer).
            pl.BlockSpec((kk, O, c_blk), lambda n, c: (0, 0, c)),
            pl.BlockSpec((O, 1), lambda n, c: (0, 0)),
        ],
        out_specs=pl.BlockSpec((1, O, lout), lambda n, c: (n, 0, 0)),
        scratch_shapes=[pltpu.VMEM((O, lout), jnp.float32)],
        compiler_params=pltpu.CompilerParams(
            dimension_semantics=("parallel", "arbitrary"),
            vmem_limit_bytes=vmem_limit),
    )(xflat, w_kk, bias.reshape(O, 1).astype(jnp.float32))

    # Crop the padded-row garbage columns and the lane-rounding tail
    # (cheap output-sized XLA slice) -> NCHW.
    out = out_flat[:, :, :h_out * wp].reshape(N, O, h_out, wp)[:, :, :, :w_out]
    return out


# -----------------------------------------------------------------------------
# Module glue.
# -----------------------------------------------------------------------------
def _l2normalize(v, eps=EPS):
    return v / (jnp.linalg.norm(v) + eps)


class SpectralNormConv2d:
    """SpectralNorm(nn.Conv2d(in_ch, out_ch, k, padding=pad)) equivalent.
    Assumes stride=1 with symmetric zero padding `pad`."""

    def __init__(self, key, in_ch, out_ch, k=3, pad=1,
                 compute_dtype=jnp.bfloat16, out_dtype=jnp.float32):
        self.in_ch, self.out_ch, self.k, self.pad = in_ch, out_ch, k, pad
        self.compute_dtype, self.out_dtype = compute_dtype, out_dtype
        k_w, k_b, k_u, k_v = jax.random.split(key, 4)
        # w_bar : (out_ch, in_ch, k, k)  (deterministic synthetic init)
        self.w_bar = jax.random.normal(k_w, (out_ch, in_ch, k, k), jnp.float32) * 0.1
        self.bias = jax.random.normal(k_b, (out_ch,), jnp.float32) * 0.1
        height = out_ch
        width = in_ch * k * k
        self.u = _l2normalize(jax.random.normal(k_u, (height,), jnp.float32))
        self.v = _l2normalize(jax.random.normal(k_v, (width,), jnp.float32))

    def forward(self, x):
        O, K = self.out_ch, self.in_ch * self.k * self.k

        # _update_u_v(): power iteration -> 1/sigma + updated u, v  (kernel 1).
        w2d = self.w_bar.reshape(O, K)
        inv_sigma, u_new, v_new = spectral_inv_sigma(w2d, self.u, self.v)
        # TODO(synk): u/v buffer updates are Python attribute writes (PyTorch
        # .data semantics); under jax.jit they must be returned as outputs.
        self.u, self.v = u_new, v_new

        # module.forward(x): Conv2d with (W/sigma) fused into the conv kernel.
        return conv2d_spectral(x, self.w_bar, self.bias, inv_sigma,
                               pad=self.pad,
                               compute_dtype=self.compute_dtype,
                               out_dtype=self.out_dtype)


if __name__ == "__main__":
    key = jax.random.PRNGKey(0)
    k_mod, k_x = jax.random.split(key)
    module = SpectralNormConv2d(k_mod, in_ch=4, out_ch=8, k=3, pad=1)
    x = jax.random.normal(k_x, (2, 4, 16, 16), jnp.float32)   # NCHW

    u0 = module.u
    y = module.forward(x)
    jax.block_until_ready(y)
    assert y.shape == (2, 8, 16, 16)

    # Pure-JAX f32 reference of the same forward semantics (sanity check).
    w2d = module.w_bar.reshape(module.out_ch, -1)
    v_ref = _l2normalize(w2d.T @ u0)
    u_ref = _l2normalize(w2d @ v_ref)
    sigma = u_ref @ (w2d @ v_ref)
    w_sn = module.w_bar / sigma
    y_ref = jax.lax.conv_general_dilated(
        x, w_sn, window_strides=(1, 1),
        padding=[(module.pad, module.pad), (module.pad, module.pad)],
        dimension_numbers=("NCHW", "OIHW", "NCHW"),
    ) + module.bias[None, :, None, None]
    assert jnp.allclose(module.u, u_ref, atol=1e-5, rtol=1e-5)
    assert jnp.allclose(y, y_ref, atol=5e-2, rtol=5e-2), \
        float(jnp.max(jnp.abs(y - y_ref)))

    print("KERNEL_OK")
</pallas_src>

<mosaic_0001>
module attributes {stable_mosaic.version = 11 : i64} {
  func.func @_spectral_norm_kernel(%arg0: i32, %arg1: memref<8x36xf32, #tpu.memory_space<vmem>>, %arg2: memref<1x8xf32, #tpu.memory_space<vmem>>, %arg3: memref<1x36xf32, #tpu.memory_space<vmem>>, %arg4: memref<1x1xf32, #tpu.memory_space<vmem>>, %arg5: memref<1x8xf32, #tpu.memory_space<vmem>>, %arg6: memref<1x36xf32, #tpu.memory_space<vmem>>) attributes {dimension_semantics = [#tpu.dimension_semantics<arbitrary>], iteration_bounds = array<i64: 1>, scalar_prefetch = 0 : i64, scratch_operands = 0 : i64, tpu.core_type = #tpu.core_type<tc>, window_params = [{pipeline_mode = #tpu.pipeline_mode<synchronous>, transform_indices = @transform_0, window_bounds = array<i64: 8, 36>}, {pipeline_mode = #tpu.pipeline_mode<synchronous>, transform_indices = @transform_1, window_bounds = array<i64: 1, 8>}, {pipeline_mode = #tpu.pipeline_mode<synchronous>, transform_indices = @transform_2, window_bounds = array<i64: 1, 36>}, {pipeline_mode = #tpu.pipeline_mode<synchronous>, transform_indices = @transform_3, window_bounds = array<i64: 1, 1>}, {pipeline_mode = #tpu.pipeline_mode<synchronous>, transform_indices = @transform_4, window_bounds = array<i64: 1, 8>}, {pipeline_mode = #tpu.pipeline_mode<synchronous>, transform_indices = @transform_5, window_bounds = array<i64: 1, 36>}]} {
    %c0 = arith.constant 0 : index
    %c0_0 = arith.constant 0 : index
    %0 = vector.load %arg1[%c0, %c0_0] : memref<8x36xf32, #tpu.memory_space<vmem>>, vector<8x36xf32>
    %c0_1 = arith.constant 0 : index
    %c0_2 = arith.constant 0 : index
    %1 = vector.load %arg2[%c0_1, %c0_2] : memref<1x8xf32, #tpu.memory_space<vmem>>, vector<1x8xf32>
    %cst = arith.constant dense<0.000000e+00> : vector<1x36xf32>
    %2 = tpu.matmul %1, %0, %cst {dimension_numbers = #tpu.dot_dimension_numbers<[1], [0], [0], [1], [0, 0, 1, 1], [], []>} : vector<1x8xf32>, vector<8x36xf32>, vector<1x36xf32> -> vector<1x36xf32>
    %3 = arith.mulf %2, %2 : vector<1x36xf32>
    %4 = vector.shape_cast %3 : vector<1x36xf32> to vector<1x1x36xf32>
    %cst_3 = arith.constant dense<0.000000e+00> : vector<1xf32>
    %5 = vector.multi_reduction <add>, %4, %cst_3 [1, 2] : vector<1x1x36xf32> to vector<1xf32>
    %6 = vector.shape_cast %5 : vector<1xf32> to vector<1x1x1xf32>
    %7 = vector.extract %6[0, 0, 0] : f32 from vector<1x1x1xf32>
    %8 = vector.broadcast %7 : f32 to vector<1x1xf32>
    %9 = math.sqrt %8 : vector<1x1xf32>
    %cst_4 = arith.constant 9.99999996E-13 : f32
    %10 = vector.broadcast %cst_4 : f32 to vector<1x1xf32>
    %11 = arith.addf %9, %10 : vector<1x1xf32>
    %12 = tpu.reciprocal %11 : vector<1x1xf32> -> vector<1x1xf32>
    %13 = vector.broadcast %12 : vector<1x1xf32> to vector<1x36xf32>
    %14 = arith.mulf %2, %13 : vector<1x36xf32>
    %cst_5 = arith.constant dense<0.000000e+00> : vector<1x8xf32>
    %15 = tpu.matmul %14, %0, %cst_5 {dimension_numbers = #tpu.dot_dimension_numbers<[1], [1], [0], [0], [0, 0, 1, 0], [], []>} : vector<1x36xf32>, vector<8x36xf32>, vector<1x8xf32> -> vector<1x8xf32>
    %16 = arith.mulf %15, %15 : vector<1x8xf32>
    %17 = vector.shape_cast %16 : vector<1x8xf32> to vector<1x1x8xf32>
    %cst_6 = arith.constant dense<0.000000e+00> : vector<1xf32>
    %18 = vector.multi_reduction <add>, %17, %cst_6 [1, 2] : vector<1x1x8xf32> to vector<1xf32>
    %19 = vector.shape_cast %18 : vector<1xf32> to vector<1x1x1xf32>
    %20 = vector.extract %19[0, 0, 0] : f32 from vector<1x1x1xf32>
    %21 = vector.broadcast %20 : f32 to vector<1x1xf32>
    %22 = math.sqrt %21 : vector<1x1xf32>
    %cst_7 = arith.constant 9.99999996E-13 : f32
    %23 = vector.broadcast %cst_7 : f32 to vector<1x1xf32>
    %24 = arith.addf %22, %23 : vector<1x1xf32>
    %25 = tpu.reciprocal %24 : vector<1x1xf32> -> vector<1x1xf32>
    %26 = vector.broadcast %25 : vector<1x1xf32> to vector<1x8xf32>
    %27 = arith.mulf %15, %26 : vector<1x8xf32>
    %cst_8 = arith.constant dense<0.000000e+00> : vector<1x8xf32>
    %28 = tpu.matmul %14, %0, %cst_8 {dimension_numbers = #tpu.dot_dimension_numbers<[1], [1], [0], [0], [0, 0, 1, 0], [], []>} : vector<1x36xf32>, vector<8x36xf32>, vector<1x8xf32> -> vector<1x8xf32>
    %29 = arith.mulf %27, %28 : vector<1x8xf32>
    %30 = vector.shape_cast %29 : vector<1x8xf32> to vector<1x1x8xf32>
    %cst_9 = arith.constant dense<0.000000e+00> : vector<1xf32>
    %31 = vector.multi_reduction <add>, %30, %cst_9 [1, 2] : vector<1x1x8xf32> to vector<1xf32>
    %32 = vector.shape_cast %31 : vector<1xf32> to vector<1x1x1xf32>
    %33 = vector.extract %32[0, 0, 0] : f32 from vector<1x1x1xf32>
    %34 = vector.broadcast %33 : f32 to vector<1x1xf32>
    %35 = tpu.reciprocal %34 : vector<1x1xf32> -> vector<1x1xf32>
    %c0_10 = arith.constant 0 : index
    %c0_11 = arith.constant 0 : index
    %36 = vector.load %arg4[%c0_10, %c0_11] : memref<1x1xf32, #tpu.memory_space<vmem>>, vector<1x1xf32>
    tpu.vector_store %arg4[%c0_10, %c0_11], %35 {strides = array<i32>} : memref<1x1xf32, #tpu.memory_space<vmem>>, vector<1x1xf32>,
    %c0_12 = arith.constant 0 : index
    %c0_13 = arith.constant 0 : index
    %37 = vector.load %arg5[%c0_12, %c0_13] : memref<1x8xf32, #tpu.memory_space<vmem>>, vector<1x8xf32>
    tpu.vector_store %arg5[%c0_12, %c0_13], %27 {strides = array<i32>} : memref<1x8xf32, #tpu.memory_space<vmem>>, vector<1x8xf32>,
    %c0_14 = arith.constant 0 : index
    %c0_15 = arith.constant 0 : index
    %38 = vector.load %arg6[%c0_14, %c0_15] : memref<1x36xf32, #tpu.memory_space<vmem>>, vector<1x36xf32>
    tpu.vector_store %arg6[%c0_14, %c0_15], %14 {strides = array<i32>} : memref<1x36xf32, #tpu.memory_space<vmem>>, vector<1x36xf32>,
    return
  }
  func.func @transform_0(%arg0: i32) -> (i32, i32) {
    %c0_i32 = arith.constant 0 : i32
    %c0_i32_0 = arith.constant 0 : i32
    %c0_i32_1 = arith.constant 0 : i32
    return %c0_i32, %c0_i32_0 : i32, i32
  }
  func.func @transform_1(%arg0: i32) -> (i32, i32) {
    %c0_i32 = arith.constant 0 : i32
    %c0_i32_0 = arith.constant 0 : i32
    %c0_i32_1 = arith.constant 0 : i32
    return %c0_i32, %c0_i32_0 : i32, i32
  }
  func.func @transform_2(%arg0: i32) -> (i32, i32) {
    %c0_i32 = arith.constant 0 : i32
    %c0_i32_0 = arith.constant 0 : i32
    %c0_i32_1 = arith.constant 0 : i32
    return %c0_i32, %c0_i32_0 : i32, i32
  }
  func.func @transform_3(%arg0: i32) -> (i32, i32) {
    %c0_i32 = arith.constant 0 : i32
    %c0_i32_0 = arith.constant 0 : i32
    %c0_i32_1 = arith.constant 0 : i32
    return %c0_i32, %c0_i32_0 : i32, i32
  }
  func.func @transform_4(%arg0: i32) -> (i32, i32) {
    %c0_i32 = arith.constant 0 : i32
    %c0_i32_0 = arith.constant 0 : i32
    %c0_i32_1 = arith.constant 0 : i32
    return %c0_i32, %c0_i32_0 : i32, i32
  }
  func.func @transform_5(%arg0: i32) -> (i32, i32) {
    %c0_i32 = arith.constant 0 : i32
    %c0_i32_0 = arith.constant 0 : i32
    %c0_i32_1 = arith.constant 0 : i32
    return %c0_i32, %c0_i32_0 : i32, i32
  }
}

</mosaic_0001>

<llo_original>
// kernel: tpu_custom_call.1
$region0: #{tpu_custom_call.1}
  #allocation0 [shape = 'u32[]', space=smem, size = 0x4, offset = 0x4, fixed_abs, tag = 'smem constant byte address 0x4 - core index']
  #allocation1 [shape = 'u32[144,128]{1,0:T(1,128)}', space=vmem, size = 0x12000, scoped, tag = 'internal scratch']
  %s0 = inlined_call_operand.hbm [shape: f32[8,36], index: 0, kind: input, shape index: {}]
  %s1 = inlined_call_operand.vmem [shape: f32[1,8], index: 1, kind: input, shape index: {}]
  %s2 = inlined_call_operand.vmem [shape: f32[1,36], index: 2, kind: input, shape index: {}]
  %s3 = inlined_call_operand.hbm [shape: f32[1,1], index: 3, kind: output, shape index: {0}]
  %s4 = inlined_call_operand.hbm [shape: f32[1,8], index: 4, kind: output, shape index: {1}]
  %s5 = inlined_call_operand.hbm [shape: f32[1,36], index: 5, kind: output, shape index: {2}]
  %6 = xla_tuple %s3, %s4, %s5
  %s7 = sld [smem:[#allocation0]]
  $region42: #{tpu_custom_call.1} parent=0
    _
  %s9 = ssub.s32 1, %s7
  %s10 = scalar_select 0, %s9, %s7
  $region1: #{tpu_custom_call.1} parent=0
    #allocation2 [shape = 'u8[4096]{0}', space=vmem, size = 0x1000, scoped, tag = 'input window, operand 0, single buffered']
    #allocation3 [shape = 's32[1]{0}', space=sflag, size = 0x4, scoped, tag = 'scoped memory for tpu_custom_call.1']
    #allocation4 [shape = 's32[1]{0}', space=sflag, size = 0x4, scoped, tag = 'scoped memory for tpu_custom_call.1']
    #allocation5 [shape = 'u8[512]{0}', space=vmem, size = 0x400, scoped, tag = 'output window, operand 0, single buffered']
    #allocation6 [shape = 'u8[512]{0}', space=vmem, size = 0x400, scoped, tag = 'output window, operand 1, single buffered']
    #allocation7 [shape = 's32[1]{0}', space=sflag, size = 0x4, scoped, tag = 'scoped memory for tpu_custom_call.1']
    #allocation8 [shape = 'u8[512]{0}', space=vmem, size = 0x400, scoped, tag = 'output window, operand 2, single buffered']
    %11 = vsyncpa [#allocation3], 0
    %12 = vsyncpa [#allocation4], 0
    %13 = vsyncpa [#allocation7], 0
    // Predicated region
    $region2: #{tpu_custom_call.1} parent=1 // pred_check
      _
    $region3: #{tpu_custom_call.1} parent=1 // pred_check_branch
      %15 = sbr.rel (0) target = $region5
    $region4: #{tpu_custom_call.1} parent=1 // pred_region
      %s17 = ssub.s32 128, 128
      %18 = vsyncadd [#allocation3], %s17
      %s20 = sshll.u32 [#allocation2], 4
      %s21 = int_to_ptr.vmem [resolvable:$true] %s20
      %23 = dma.hbm_to_vmem [thread:$0]  %s0, 128, %s21, [#allocation3]
    $region5: #{tpu_custom_call.1} parent=1 // pred_fallthru
      _
    // Predicated region
    $region6: #{tpu_custom_call.1} parent=1 // pred_check
      _
    $region7: #{tpu_custom_call.1} parent=1 // pred_check_branch
      %25 = sbr.rel (0) target = $region9
    $region8: #{tpu_custom_call.1} parent=1 // pred_region
      _
    $region9: #{tpu_custom_call.1} parent=1 // pred_fallthru
      _
    // Predicated region
    $region10: #{tpu_custom_call.1} parent=1 // pred_check
      _
    $region11: #{tpu_custom_call.1} parent=1 // pred_check_branch
      %27 = sbr.rel (0) target = $region13
    $region12: #{tpu_custom_call.1} parent=1 // pred_region
      _
    $region13: #{tpu_custom_call.1} parent=1 // pred_fallthru
      _
    // Predicated region
    $region14: #{tpu_custom_call.1} parent=1 // pred_check
      _
    $region15: #{tpu_custom_call.1} parent=1 // pred_check_branch
      %29 = sbr.rel (0) target = $region17
    $region16: #{tpu_custom_call.1} parent=1 // pred_region
      %30 = dma.done [#allocation3], 128
    $region17: #{tpu_custom_call.1} parent=1 // pred_fallthru
      _
    %v31 = vld [vmem:[#allocation2] sm:$0xff]
    %v32 = vld [vmem:[%s1] sm:$0x1]
    %vm33 = vcmask 64512
    %v35 = vsel %vm33, %v32, 0
    %37 = vmatprep.subr.mxu0 0.0
    %38 = vmatpush1.msra.mxu0 %v31
    %39 = vmatprep.subr.mxu0 0.0
    %40 = vmatpush1.msra.mxu0 0.0
    %41 = vmatprep.subr.mxu0 0.0
    %42 = vmatpush1.msra.mxu0 0.0
    %43 = vmatprep.subr.mxu0 0.0
    %44 = vmatpush1.msra.mxu0 0.0
    %45 = vmatprep.subr.mxu0 0.0
    %46 = vmatpush1.msra.mxu0 0.0
    %47 = vmatprep.subr.mxu0 0.0
    %48 = vmatpush1.msra.mxu0 0.0
    %49 = vmatprep.subr.mxu0 0.0
    %50 = vmatpush1.msra.mxu0 0.0
    %51 = vmatprep.subr.mxu0 0.0
    %52 = vmatpush1.msra.mxu0 0.0
    %53 = vmatprep.subr.mxu0 0.0
    %54 = vmatpush1.msra.mxu0 0.0
    %55 = vmatprep.subr.mxu0 0.0
    %56 = vmatpush1.msra.mxu0 0.0
    %57 = vmatprep.subr.mxu0 0.0
    %58 = vmatpush1.msra.mxu0 0.0
    %59 = vmatprep.subr.mxu0 0.0
    %60 = vmatpush1.msra.mxu0 0.0
    %61 = vmatprep.subr.mxu0 0.0
    %62 = vmatpush1.msra.mxu0 0.0
    %63 = vmatprep.subr.mxu0 0.0
    %64 = vmatpush1.msra.mxu0 0.0
    %65 = vmatprep.subr.mxu0 0.0
    %66 = vmatpush1.msra.mxu0 0.0
    %67 = vmatprep.subr.mxu0 0.0
    %68 = vmatpush1.msra.mxu0 0.0
    %69 = vmatprep.subr.mxu0 0.0
    %70 = vmatpush1.msra.mxu0 0.0
    %71 = vmatprep.subr.mxu0 0.0
    %72 = vmatpush1.msra.mxu0 0.0
    %73 = vmatprep.subr.mxu0 0.0
    %74 = vmatpush1.msra.mxu0 0.0
    %75 = vmatprep.subr.mxu0 0.0
    %76 = vmatpush1.msra.mxu0 0.0
    %77 = vmatprep.subr.mxu0 0.0
    %78 = vmatpush1.msra.mxu0 0.0
    %79 = vmatprep.subr.mxu0 0.0
    %80 = vmatpush1.msra.mxu0 0.0
    %81 = vmatprep.subr.mxu0 0.0
    %82 = vmatpush1.msra.mxu0 0.0
    %83 = vmatprep.subr.mxu0 0.0
    %84 = vmatpush1.msra.mxu0 0.0
    %85 = vmatprep.subr.mxu0 0.0
    %86 = vmatpush1.msra.mxu0 0.0
    %87 = vmatprep.subr.mxu0 0.0
    %88 = vmatpush1.msra.mxu0 0.0
    %89 = vmatprep.subr.mxu0 0.0
    %90 = vmatpush1.msra.mxu0 0.0
    %91 = vmatprep.subr.mxu0 0.0
    %92 = vmatpush1.msra.mxu0 0.0
    %93 = vmatprep.subr.mxu0 0.0
    %94 = vmatpush1.msra.mxu0 0.0
    %95 = vmatprep.subr.mxu0 0.0
    %96 = vmatpush1.msra.mxu0 0.0
    %97 = vmatprep.subr.mxu0 0.0
    %98 = vmatpush1.msra.mxu0 0.0
    %99 = vmatprep.subr.mxu0 0.0
    %100 = vmatpush1.msra.mxu0 0.0
    %101 = vmatprep.mubr.f32.mxu0 0.0
    %102 = vmatmul.mubr.f32.gmra.mrb[0].mxu0 %v35
    %v103 = vpop.f32.mrb[0].mxu0
    %v104 = vadd.f32 0.0, %v103
    %v105 = vpop.f32.mrb[0].mxu0
    %106 = vdwg.mxu0
    %v107 = vmul.f32 %v104, %v104
    %vm108 = vcmask 286720
    %v109 = vsel %vm108, %v107, 0.0
    %110 = vadd.xlane.f32.xlu0 %v109
    %v111 = vpop.xlane.xlu0 %110
    %v112 = vrot.slane %v111, 4
    %v113 = vadd.f32 %v111, %v112
    %v114 = vrot.slane %v113, 2
    %v115 = vadd.f32 %v113, %v114
    %v116 = vrot.slane %v115, 1
    %v117 = vadd.f32 %v115, %v116
    %s118 = vtos %v117
    %v119 = vstv %s118
    %v120 = vrsqrt.pop %v119
    %v121 = vmul.f32 %v119, %v120
    %vm122 = vcmp.eq.f32.partialorder %v119, inf
    %v123 = vsel %vm122, %v119, %v121
    %vm124 = vcmp.eq.f32.partialorder %v119, 0.0
    %v125 = vand.u32 %v119, 2147483648
    %v126 = vsel %vm124, %v125, %v123
    %v127 = vadd.f32 %v126, 1e-12
    %v128 = vrcp.pop %v127
    %v129 = vmul.f32 %v104, %v128
    %vm130 = vcmask 293888
    %v132 = vsel %vm130, %v129, 0
    %v135 = vsel %vm130, %v31, 0
    %137 = vmatprep.subr.mxu0 0.0
    %138 = vmatpush1.xpose.msra.mxu0 %v135
    %139 = vmatprep.subr.mxu0 0.0
    %140 = vmatpush1.xpose.msra.mxu0 0.0
    %141 = vmatprep.subr.mxu0 0.0
    %142 = vmatpush1.xpose.msra.mxu0 0.0
    %143 = vmatprep.subr.mxu0 0.0
    %144 = vmatpush1.xpose.msra.mxu0 0.0
    %145 = vmatprep.subr.mxu0 0.0
    %146 = vmatpush1.xpose.msra.mxu0 0.0
    %147 = vmatprep.subr.mxu0 0.0
    %148 = vmatpush1.xpose.msra.mxu0 0.0
    %149 = vmatprep.subr.mxu0 0.0
    %150 = vmatpush1.xpose.msra.mxu0 0.0
    %151 = vmatprep.subr.mxu0 0.0
    %152 = vmatpush1.xpose.msra.mxu0 0.0
    %153 = vmatprep.subr.mxu0 0.0
    %154 = vmatpush1.xpose.msra.mxu0 0.0
    %155 = vmatprep.subr.mxu0 0.0
    %156 = vmatpush1.xpose.msra.mxu0 0.0
    %157 = vmatprep.subr.mxu0 0.0
    %158 = vmatpush1.xpose.msra.mxu0 0.0
    %159 = vmatprep.subr.mxu0 0.0
    %160 = vmatpush1.xpose.msra.mxu0 0.0
    %161 = vmatprep.subr.mxu0 0.0
    %162 = vmatpush1.xpose.msra.mxu0 0.0
    %163 = vmatprep.subr.mxu0 0.0
    %164 = vmatpush1.xpose.msra.mxu0 0.0
    %165 = vmatprep.subr.mxu0 0.0
    %166 = vmatpush1.xpose.msra.mxu0 0.0
    %167 = vmatprep.subr.mxu0 0.0
    %168 = vmatpush1.xpose.msra.mxu0 0.0
    %169 = vmatprep.subr.mxu0 0.0
    %170 = vmatpush1.xpose.msra.mxu0 0.0
    %171 = vmatprep.subr.mxu0 0.0
    %172 = vmatpush1.xpose.msra.mxu0 0.0
    %173 = vmatprep.subr.mxu0 0.0
    %174 = vmatpush1.xpose.msra.mxu0 0.0
    %175 = vmatprep.subr.mxu0 0.0
    %176 = vmatpush1.xpose.msra.mxu0 0.0
    %177 = vmatprep.subr.mxu0 0.0
    %178 = vmatpush1.xpose.msra.mxu0 0.0
    %179 = vmatprep.subr.mxu0 0.0
    %180 = vmatpush1.xpose.msra.mxu0 0.0
    %181 = vmatprep.subr.mxu0 0.0
    %182 = vmatpush1.xpose.msra.mxu0 0.0
    %183 = vmatprep.subr.mxu0 0.0
    %184 = vmatpush1.xpose.msra.mxu0 0.0
    %185 = vmatprep.subr.mxu0 0.0
    %186 = vmatpush1.xpose.msra.mxu0 0.0
    %187 = vmatprep.subr.mxu0 0.0
    %188 = vmatpush1.xpose.msra.mxu0 0.0
    %189 = vmatprep.subr.mxu0 0.0
    %190 = vmatpush1.xpose.msra.mxu0 0.0
    %191 = vmatprep.subr.mxu0 0.0
    %192 = vmatpush1.xpose.msra.mxu0 0.0
    %193 = vmatprep.subr.mxu0 0.0
    %194 = vmatpush1.xpose.msra.mxu0 0.0
    %195 = vmatprep.subr.mxu0 0.0
    %196 = vmatpush1.xpose.msra.mxu0 0.0
    %197 = vmatprep.subr.mxu0 0.0
    %198 = vmatpush1.xpose.msra.mxu0 0.0
    %199 = vmatprep.subr.mxu0 0.0
    %200 = vmatpush1.xpose.msra.mxu0 0.0
    %201 = vmatprep.mubr.f32.mxu0 0.0
    %202 = vmatmul.mubr.f32.gmra.mrb[0].mxu0 %v132
    %v203 = vpop.f32.mrb[0].mxu0
    %v204 = vadd.f32 0.0, %v203
    %v205 = vpop.f32.mrb[0].mxu0
    %206 = vdwg.mxu0
    %v207 = vmul.f32 %v204, %v204
    %vm208 = vcmask 57344
    %v209 = vsel %vm208, %v207, 0.0
    %210 = vadd.xlane.f32.xlu0 %v209
    %v211 = vpop.xlane.xlu0 %210
    %v212 = vrot.slane %v211, 4
    %v213 = vadd.f32 %v211, %v212
    %v214 = vrot.slane %v213, 2
    %v215 = vadd.f32 %v213, %v214
    %v216 = vrot.slane %v215, 1
    %v217 = vadd.f32 %v215, %v216
    %s218 = vtos %v217
    %v219 = vstv %s218
    %v220 = vrsqrt.pop %v219
    %v221 = vmul.f32 %v219, %v220
    %vm222 = vcmp.eq.f32.partialorder %v219, inf
    %v223 = vsel %vm222, %v219, %v221
    %vm224 = vcmp.eq.f32.partialorder %v219, 0.0
    %v225 = vand.u32 %v219, 2147483648
    %v226 = vsel %vm224, %v225, %v223
    %v227 = vadd.f32 %v226, 1e-12
    %v228 = vrcp.pop %v227
    %v229 = vmul.f32 %v204, %v228
    %v230 = vmul.f32 %v229, %v204
    %v231 = vsel %vm208, %v230, 0.0
    %232 = vadd.xlane.f32.xlu0 %v231
    %v233 = vpop.xlane.xlu0 %232
    %v234 = vrot.slane %v233, 4
    %v235 = vadd.f32 %v233, %v234
    %v236 = vrot.slane %v235, 2
    %v237 = vadd.f32 %v235, %v236
    %v238 = vrot.slane %v237, 1
    %v239 = vadd.f32 %v237, %v238
    %s240 = vtos %v239
    %v241 = vstv %s240
    %v242 = vrcp.pop %v241
    %vm243 = vcmask 0
    %244 = vst.msk [vmem:[#allocation5] sm:$0x1] %vm243, %v242
    %245 = vst.msk [vmem:[#allocation6] sm:$0x1] %vm208, %v229
    %246 = vst.msk [vmem:[#allocation8] sm:$0x1] %vm108, %v129
    // Predicated region
    $region18: #{tpu_custom_call.1} parent=1 // pred_check
      _
    $region19: #{tpu_custom_call.1} parent=1 // pred_check_branch
      %248 = sbr.rel (0) target = $region21
    $region20: #{tpu_custom_call.1} parent=1 // pred_region
      %s250 = ssub.s32 16, 16
      %251 = vsyncadd [#allocation4], %s250
      %s253 = sshll.u32 [#allocation5], 4
      %s254 = int_to_ptr.vmem [resolvable:$true] %s253
      %256 = dma.vmem_to_hbm [thread:$0]  %s254, 16, %s3, [#allocation4]
    $region21: #{tpu_custom_call.1} parent=1 // pred_fallthru
      _
    // Predicated region
    $region22: #{tpu_custom_call.1} parent=1 // pred_check
      _
    $region23: #{tpu_custom_call.1} parent=1 // pred_check_branch
      %258 = sbr.rel (0) target = $region25
    $region24: #{tpu_custom_call.1} parent=1 // pred_region
      %s260 = ssub.s32 16, 16
      %261 = vsyncadd [#allocation7], %s260
      %s263 = sshll.u32 [#allocation6], 4
      %s264 = int_to_ptr.vmem [resolvable:$true] %s263
      %266 = dma.vmem_to_hbm [thread:$0]  %s264, 16, %s4, [#allocation7]
    $region25: #{tpu_custom_call.1} parent=1 // pred_fallthru
      _
    // Predicated region
    $region26: #{tpu_custom_call.1} parent=1 // pred_check
      _
    $region27: #{tpu_custom_call.1} parent=1 // pred_check_branch
      %268 = sbr.rel (0) target = $region29
    $region28: #{tpu_custom_call.1} parent=1 // pred_region
      %s270 = ssub.s32 16, 16
      %271 = vsyncadd [#allocation7], %s270
      %s273 = sshll.u32 [#allocation8], 4
      %s274 = int_to_ptr.vmem [resolvable:$true] %s273
      %276 = dma.vmem_to_hbm [thread:$0]  %s274, 16, %s5, [#allocation7]
    $region29: #{tpu_custom_call.1} parent=1 // pred_fallthru
      _
    // Predicated region
    $region30: #{tpu_custom_call.1} parent=1 // pred_check
      _
    $region31: #{tpu_custom_call.1} parent=1 // pred_check_branch
      %278 = sbr.rel (0) target = $region33
    $region32: #{tpu_custom_call.1} parent=1 // pred_region
      %279 = dma.done [#allocation4], 16
    $region33: #{tpu_custom_call.1} parent=1 // pred_fallthru
      _
    // Predicated region
    $region34: #{tpu_custom_call.1} parent=1 // pred_check
      _
    $region35: #{tpu_custom_call.1} parent=1 // pred_check_branch
      %281 = sbr.rel (0) target = $region37
    $region36: #{tpu_custom_call.1} parent=1 // pred_region
      %282 = dma.done [#allocation7], 16
    $region37: #{tpu_custom_call.1} parent=1 // pred_fallthru
      _
    // Predicated region
    $region38: #{tpu_custom_call.1} parent=1 // pred_check
      _
    $region39: #{tpu_custom_call.1} parent=1 // pred_check_branch
      %284 = sbr.rel (0) target = $region41
    $region40: #{tpu_custom_call.1} parent=1 // pred_region
      %285 = dma.done [#allocation7], 16
    $region41: #{tpu_custom_call.1} parent=1 // pred_fallthru
      _
    %286 = vsyncpa [#allocation3], 1
    %287 = vsyncpa [#allocation4], 1
    %288 = vsyncpa [#allocation7], 1

</llo_original>
